<compile_context>
chip_gen: v5e
topology: v5e:2x2
jax: 0.10.0
libtpu: 0.0.40
codegen_flags: <defaults>
</compile_context>

<pallas_src>
import jax
import jax.numpy as jnp
from jax.experimental import pallas as pl
from jax.experimental.pallas import tpu as pltpu

NHEAD = 4
LN_EPS = 1e-5
# Set to jnp.bfloat16 on v6e/v7x at production sizes (~2x MXU throughput, f32 accumulate).
MXU_DTYPE = jnp.float32


def _layer_norm(x, gamma, beta):
    mu = jnp.mean(x, axis=-1, keepdims=True)
    var = jnp.mean((x - mu) ** 2, axis=-1, keepdims=True)
    return (x - mu) * jax.lax.rsqrt(var + LN_EPS) * gamma + beta


# -----------------------------------------------------------------------------------
# Kernel: one grid step = one (batch element, layer) pair.
#   x_ref    : (S, D)    input tokens of this batch element (only read at l == 0)
#   wqkv_ref : (D, 3D)   [Wq*scale | Wk | Wv]
#   wo_ref   : (D, D)    output projection (rows head-major)
#   w1_ref   : (D, Hff)  FFN up        w2_ref: (Hff, D) FFN down
#   vecs_ref : (8, W)    rows = [bqkv*, b1, bo, g1, be1, b2, g2, be2], W = max(3D, Hff)
#   out_ref  : (S, D)    running activation; resident across the layer ("arbitrary") axis
# -----------------------------------------------------------------------------------
def decoder_layer_kernel(x_ref, wqkv_ref, wo_ref, w1_ref, w2_ref, vecs_ref, out_ref):
    l = pl.program_id(1)

    @pl.when(l == 0)
    def _():
        out_ref[...] = x_ref[...]

    x = out_ref[...].astype(jnp.float32)                     # (S, D)
    S, D = x.shape
    hd = D // NHEAD
    hidden = w1_ref.shape[1]

    vec = vecs_ref[...]                                       # (8, W)
    bqkv = vec[0:1, : 3 * D]                                  # (1, 3D) (q part pre-scaled)
    b1 = vec[1:2, :hidden]
    bo = vec[2:3, :D]
    g1 = vec[3:4, :D]
    be1 = vec[4:5, :D]
    b2 = vec[5:6, :D]
    g2 = vec[6:7, :D]
    be2 = vec[7:8, :D]

    # ---- Multi-head self-attention (per batch element; no cross-batch mask) ----------
    qkv = jnp.dot(x.astype(MXU_DTYPE), wqkv_ref[...].astype(MXU_DTYPE),
                  preferred_element_type=jnp.float32) + bqkv           # (S, 3D)
    wo = wo_ref[...]                                                   # (D, D)
    attn = None
    for h in range(NHEAD):
        q_h = qkv[:, h * hd:(h + 1) * hd]                              # (S, hd), scaled
        k_h = qkv[:, D + h * hd:D + (h + 1) * hd]                      # (S, hd)
        v_h = qkv[:, 2 * D + h * hd:2 * D + (h + 1) * hd]              # (S, hd)
        s_h = jax.lax.dot_general(q_h.astype(MXU_DTYPE), k_h.astype(MXU_DTYPE),
                                  (((1,), (1,)), ((), ())),
                                  preferred_element_type=jnp.float32)  # (S, S)
        s_h = s_h - jnp.max(s_h, axis=-1, keepdims=True)
        p_h = jnp.exp(s_h)
        p_h = p_h / jnp.sum(p_h, axis=-1, keepdims=True)               # exact reciprocal
        o_h = jnp.dot(p_h.astype(MXU_DTYPE), v_h.astype(MXU_DTYPE),
                      preferred_element_type=jnp.float32)              # (S, hd)
        part = jnp.dot(o_h.astype(MXU_DTYPE),
                       wo[h * hd:(h + 1) * hd, :].astype(MXU_DTYPE),
                       preferred_element_type=jnp.float32)             # (S, D)
        attn = part if attn is None else attn + part
    attn = attn + bo

    # ---- Residual + LayerNorm1 (post-norm) -------------------------------------------
    x = _layer_norm(x + attn, g1, be1)

    # ---- Feed-forward (ReLU) -----------------------------------------------------------
    h1 = jnp.dot(x.astype(MXU_DTYPE), w1_ref[...].astype(MXU_DTYPE),
                 preferred_element_type=jnp.float32) + b1
    h1 = jnp.maximum(h1, 0.0)
    ff = jnp.dot(h1.astype(MXU_DTYPE), w2_ref[...].astype(MXU_DTYPE),
                 preferred_element_type=jnp.float32) + b2

    # ---- Residual + LayerNorm2 ----------------------------------------------------------
    x = _layer_norm(x + ff, g2, be2)
    out_ref[...] = x.astype(out_ref.dtype)


# -----------------------------------------------------------------------------------
# Wrapper: pack weights (QKV concatenated, scale folded, all bias/LN vectors in one
# operand) and run grid=(B, L): batch "parallel", layer "arbitrary".
# -----------------------------------------------------------------------------------
def _pack_params(params, nhead=NHEAD):
    wqkv_l, wo_l, w1_l, w2_l, vecs_l = [], [], [], [], []
    for (wq, bq, wk, bk, wv, bv, wo, bo, g1, be1, w1, b1, w2, b2, g2, be2) in params:
        D = wq.shape[0]
        hidden = w1.shape[1]
        hd = D // nhead
        scale = 1.0 / float(hd) ** 0.5
        wqkv = jnp.concatenate([wq * scale, wk, wv], axis=1)            # (D, 3D)
        bqkv = jnp.concatenate([bq * scale, bk, bv], axis=0)            # (3D,)
        width = max(3 * D, hidden)

        def row(v):
            return jnp.pad(v.astype(jnp.float32), (0, width - v.shape[0]))

        vecs = jnp.stack([row(bqkv), row(b1), row(bo), row(g1), row(be1),
                          row(b2), row(g2), row(be2)], axis=0)           # (8, width)
        wqkv_l.append(wqkv)
        wo_l.append(wo)
        w1_l.append(w1)
        w2_l.append(w2)
        vecs_l.append(vecs)
    return (jnp.stack(wqkv_l), jnp.stack(wo_l), jnp.stack(w1_l),
            jnp.stack(w2_l), jnp.stack(vecs_l))


def transformer_decoder_pallas(z, params):
    B, S, D = z.shape
    L = len(params)
    wqkv, wo, w1, w2, vecs = _pack_params(params)
    hidden = w1.shape[-1]
    width = vecs.shape[-1]

    out = pl.pallas_call(
        decoder_layer_kernel,
        out_shape=jax.ShapeDtypeStruct((B, S, D), z.dtype),
        grid=(B, L),
        in_specs=[
            pl.BlockSpec((None, S, D), lambda b, l: (b, 0, 0)),         # x (resident per b)
            pl.BlockSpec((None, D, 3 * D), lambda b, l: (l, 0, 0)),     # Wqkv  (layer-streamed)
            pl.BlockSpec((None, D, D), lambda b, l: (l, 0, 0)),         # Wo
            pl.BlockSpec((None, D, hidden), lambda b, l: (l, 0, 0)),    # W1
            pl.BlockSpec((None, hidden, D), lambda b, l: (l, 0, 0)),    # W2
            pl.BlockSpec((None, 8, width), lambda b, l: (l, 0, 0)),     # packed vectors
        ],
        out_specs=pl.BlockSpec((None, S, D), lambda b, l: (b, 0, 0)),   # accumulator over l
        input_output_aliases={0: 0},
        compiler_params=pltpu.CompilerParams(
            dimension_semantics=("parallel", "arbitrary"),
            vmem_limit_bytes=32 * 1024 * 1024,
        ),
    )(z, wqkv, wo, w1, w2, vecs)
    return out


# ---------------- pure-JAX reference (same math, for verification) ----------------
def transformer_decoder_ref(z, params):
    x = z
    for (wq, bq, wk, bk, wv, bv, wo, bo, g1, be1, w1, b1, w2, b2, g2, be2) in params:
        B, S, D = x.shape
        hd = D // NHEAD
        q = (x @ wq + bq).reshape(B, S, NHEAD, hd).transpose(0, 2, 1, 3)
        k = (x @ wk + bk).reshape(B, S, NHEAD, hd).transpose(0, 2, 1, 3)
        v = (x @ wv + bv).reshape(B, S, NHEAD, hd).transpose(0, 2, 1, 3)
        s = jnp.einsum("bhqd,bhkd->bhqk", q, k) / jnp.sqrt(float(hd))
        p = jax.nn.softmax(s, axis=-1)
        a = jnp.einsum("bhqk,bhkd->bhqd", p, v).transpose(0, 2, 1, 3).reshape(B, S, D)
        a = a @ wo + bo
        x = _layer_norm(x + a, g1, be1)
        ff = jnp.maximum(x @ w1 + b1, 0.0) @ w2 + b2
        x = _layer_norm(x + ff, g2, be2)
    return x


def init_params(key, input_dim, hidden_dim, num_layers):
    params = []
    D, H = input_dim, hidden_dim
    for i in range(num_layers):
        k = jax.random.split(jax.random.fold_in(key, i), 16)
        wq = 0.05 * jax.random.normal(k[0], (D, D), jnp.float32)
        bq = 0.05 * jax.random.normal(k[1], (D,), jnp.float32)
        wk = 0.05 * jax.random.normal(k[2], (D, D), jnp.float32)
        bk = 0.05 * jax.random.normal(k[3], (D,), jnp.float32)
        wv = 0.05 * jax.random.normal(k[4], (D, D), jnp.float32)
        bv = 0.05 * jax.random.normal(k[5], (D,), jnp.float32)
        wo = 0.05 * jax.random.normal(k[6], (D, D), jnp.float32)
        bo = 0.05 * jax.random.normal(k[7], (D,), jnp.float32)
        g1 = 1.0 + 0.05 * jax.random.normal(k[8], (D,), jnp.float32)
        be1 = 0.05 * jax.random.normal(k[9], (D,), jnp.float32)
        w1 = 0.05 * jax.random.normal(k[10], (D, H), jnp.float32)
        b1 = 0.05 * jax.random.normal(k[11], (H,), jnp.float32)
        w2 = 0.05 * jax.random.normal(k[12], (H, D), jnp.float32)
        b2 = 0.05 * jax.random.normal(k[13], (D,), jnp.float32)
        g2 = 1.0 + 0.05 * jax.random.normal(k[14], (D,), jnp.float32)
        be2 = 0.05 * jax.random.normal(k[15], (D,), jnp.float32)
        params.append((wq, bq, wk, bk, wv, bv, wo, bo,
                       g1, be1, w1, b1, w2, b2, g2, be2))
    return params


if __name__ == "__main__":
    B, S, D, H = 2, 8, 32, 64     # batch, seq, d_model (input_dim), dim_feedforward (hidden_dim)
    key = jax.random.PRNGKey(0)
    kz, kp = jax.random.split(key)
    z = jax.random.normal(kz, (B, S, D), jnp.float32)
    params = init_params(kp, D, H, num_layers=2)

    # Reference first (the kernel aliases its input buffer to the output).
    ref = transformer_decoder_ref(z, params)

    out = transformer_decoder_pallas(z, params)
    out = jax.block_until_ready(out)

    assert out.shape == (B, S, D)
    # Tolerance covers MXU f32 matmul precision differences between the Pallas and XLA paths.
    assert jnp.allclose(out, ref, rtol=2e-3, atol=2e-3), float(jnp.max(jnp.abs(out - ref)))
    print("KERNEL_OK")
</pallas_src>

<mosaic_0001>
module attributes {stable_mosaic.version = 11 : i64} {
  func.func @decoder_layer_kernel(%arg0: i32, %arg1: i32, %arg2: memref<1x8x32xf32, #tpu.memory_space<vmem>>, %arg3: memref<1x32x96xf32, #tpu.memory_space<vmem>>, %arg4: memref<1x32x32xf32, #tpu.memory_space<vmem>>, %arg5: memref<1x32x64xf32, #tpu.memory_space<vmem>>, %arg6: memref<1x64x32xf32, #tpu.memory_space<vmem>>, %arg7: memref<1x8x96xf32, #tpu.memory_space<vmem>>, %arg8: memref<1x8x32xf32, #tpu.memory_space<vmem>>) attributes {dimension_semantics = [#tpu.dimension_semantics<parallel>, #tpu.dimension_semantics<arbitrary>], iteration_bounds = array<i64: 2, 2>, scalar_prefetch = 0 : i64, scratch_operands = 0 : i64, tpu.core_type = #tpu.core_type<tc>, window_params = [{transform_indices = @transform_0, window_bounds = array<i64: 1, 8, 32>}, {transform_indices = @transform_1, window_bounds = array<i64: 1, 32, 96>}, {transform_indices = @transform_2, window_bounds = array<i64: 1, 32, 32>}, {transform_indices = @transform_3, window_bounds = array<i64: 1, 32, 64>}, {transform_indices = @transform_4, window_bounds = array<i64: 1, 64, 32>}, {transform_indices = @transform_5, window_bounds = array<i64: 1, 8, 96>}, {transform_indices = @transform_6, window_bounds = array<i64: 1, 8, 32>}]} {
    %c0_i32 = arith.constant 0 : i32
    %0 = arith.cmpi eq, %arg1, %c0_i32 : i32
    %1 = arith.extui %0 : i1 to i32
    %c0_i32_0 = arith.constant 0 : i32
    %2 = arith.cmpi ne, %1, %c0_i32_0 : i32
    scf.if %2 {
      %c0_54 = arith.constant 0 : index
      %c0_55 = arith.constant 0 : index
      %c0_56 = arith.constant 0 : index
      %152 = vector.load %arg2[%c0_54, %c0_55, %c0_56] : memref<1x8x32xf32, #tpu.memory_space<vmem>>, vector<1x8x32xf32>
      %153 = vector.shape_cast %152 : vector<1x8x32xf32> to vector<8x32xf32>
      %c0_57 = arith.constant 0 : index
      %c0_58 = arith.constant 0 : index
      %c0_59 = arith.constant 0 : index
      %154 = vector.load %arg8[%c0_57, %c0_58, %c0_59] : memref<1x8x32xf32, #tpu.memory_space<vmem>>, vector<1x8x32xf32>
      %155 = vector.shape_cast %154 : vector<1x8x32xf32> to vector<8x32xf32>
      %156 = vector.shape_cast %153 : vector<8x32xf32> to vector<1x8x32xf32>
      tpu.vector_store %arg8[%c0_57, %c0_58, %c0_59], %156 {strides = array<i32>} : memref<1x8x32xf32, #tpu.memory_space<vmem>>, vector<1x8x32xf32>,
    } else {
    }
    %c0 = arith.constant 0 : index
    %c0_1 = arith.constant 0 : index
    %c0_2 = arith.constant 0 : index
    %3 = vector.load %arg8[%c0, %c0_1, %c0_2] : memref<1x8x32xf32, #tpu.memory_space<vmem>>, vector<1x8x32xf32>
    %4 = vector.shape_cast %3 : vector<1x8x32xf32> to vector<8x32xf32>
    %c0_3 = arith.constant 0 : index
    %c0_4 = arith.constant 0 : index
    %c0_5 = arith.constant 0 : index
    %5 = vector.load %arg7[%c0_3, %c0_4, %c0_5] : memref<1x8x96xf32, #tpu.memory_space<vmem>>, vector<1x8x96xf32>
    %6 = vector.shape_cast %5 : vector<1x8x96xf32> to vector<8x96xf32>
    %7 = vector.extract_strided_slice %6 {offsets = [0, 0], sizes = [1, 96], strides = [1, 1]} : vector<8x96xf32> to vector<1x96xf32>
    %8 = vector.extract_strided_slice %6 {offsets = [1, 0], sizes = [1, 64], strides = [1, 1]} : vector<8x96xf32> to vector<1x64xf32>
    %9 = vector.extract_strided_slice %6 {offsets = [2, 0], sizes = [1, 32], strides = [1, 1]} : vector<8x96xf32> to vector<1x32xf32>
    %10 = vector.extract_strided_slice %6 {offsets = [3, 0], sizes = [1, 32], strides = [1, 1]} : vector<8x96xf32> to vector<1x32xf32>
    %11 = vector.extract_strided_slice %6 {offsets = [4, 0], sizes = [1, 32], strides = [1, 1]} : vector<8x96xf32> to vector<1x32xf32>
    %12 = vector.extract_strided_slice %6 {offsets = [5, 0], sizes = [1, 32], strides = [1, 1]} : vector<8x96xf32> to vector<1x32xf32>
    %13 = vector.extract_strided_slice %6 {offsets = [6, 0], sizes = [1, 32], strides = [1, 1]} : vector<8x96xf32> to vector<1x32xf32>
    %14 = vector.extract_strided_slice %6 {offsets = [7, 0], sizes = [1, 32], strides = [1, 1]} : vector<8x96xf32> to vector<1x32xf32>
    %c0_6 = arith.constant 0 : index
    %c0_7 = arith.constant 0 : index
    %c0_8 = arith.constant 0 : index
    %15 = vector.load %arg3[%c0_6, %c0_7, %c0_8] : memref<1x32x96xf32, #tpu.memory_space<vmem>>, vector<1x32x96xf32>
    %16 = vector.shape_cast %15 : vector<1x32x96xf32> to vector<32x96xf32>
    %cst = arith.constant dense<0.000000e+00> : vector<8x96xf32>
    %17 = tpu.matmul %4, %16, %cst {dimension_numbers = #tpu.dot_dimension_numbers<[1], [0], [0], [1], [0, 0, 1, 1], [], []>} : vector<8x32xf32>, vector<32x96xf32>, vector<8x96xf32> -> vector<8x96xf32>
    %18 = vector.broadcast %7 : vector<1x96xf32> to vector<8x96xf32>
    %19 = arith.addf %17, %18 : vector<8x96xf32>
    %c0_9 = arith.constant 0 : index
    %c0_10 = arith.constant 0 : index
    %c0_11 = arith.constant 0 : index
    %20 = vector.load %arg4[%c0_9, %c0_10, %c0_11] : memref<1x32x32xf32, #tpu.memory_space<vmem>>, vector<1x32x32xf32>
    %21 = vector.shape_cast %20 : vector<1x32x32xf32> to vector<32x32xf32>
    %22 = vector.extract_strided_slice %19 {offsets = [0, 0], sizes = [8, 8], strides = [1, 1]} : vector<8x96xf32> to vector<8x8xf32>
    %23 = vector.extract_strided_slice %19 {offsets = [0, 32], sizes = [8, 8], strides = [1, 1]} : vector<8x96xf32> to vector<8x8xf32>
    %24 = vector.extract_strided_slice %19 {offsets = [0, 64], sizes = [8, 8], strides = [1, 1]} : vector<8x96xf32> to vector<8x8xf32>
    %cst_12 = arith.constant dense<0.000000e+00> : vector<8x8xf32>
    %25 = tpu.matmul %22, %23, %cst_12 {dimension_numbers = #tpu.dot_dimension_numbers<[1], [1], [0], [0], [0, 0, 1, 0], [], []>} : vector<8x8xf32>, vector<8x8xf32>, vector<8x8xf32> -> vector<8x8xf32>
    %cst_13 = arith.constant dense<0xFF800000> : vector<8xf32>
    %26 = vector.multi_reduction <maximumf>, %25, %cst_13 [1] : vector<8x8xf32> to vector<8xf32>
    %27 = vector.shape_cast %26 : vector<8xf32> to vector<8x1xf32>
    %28 = vector.broadcast %27 : vector<8x1xf32> to vector<8x8xf32>
    %29 = arith.subf %25, %28 : vector<8x8xf32>
    %30 = math.exp %29 : vector<8x8xf32>
    %cst_14 = arith.constant dense<0.000000e+00> : vector<8xf32>
    %31 = vector.multi_reduction <add>, %30, %cst_14 [1] : vector<8x8xf32> to vector<8xf32>
    %32 = vector.shape_cast %31 : vector<8xf32> to vector<8x1xf32>
    %33 = vector.broadcast %32 : vector<8x1xf32> to vector<8x8xf32>
    %34 = arith.divf %30, %33 : vector<8x8xf32>
    %cst_15 = arith.constant dense<0.000000e+00> : vector<8x8xf32>
    %35 = tpu.matmul %34, %24, %cst_15 {dimension_numbers = #tpu.dot_dimension_numbers<[1], [0], [0], [1], [0, 0, 1, 1], [], []>} : vector<8x8xf32>, vector<8x8xf32>, vector<8x8xf32> -> vector<8x8xf32>
    %36 = vector.extract_strided_slice %21 {offsets = [0, 0], sizes = [8, 32], strides = [1, 1]} : vector<32x32xf32> to vector<8x32xf32>
    %cst_16 = arith.constant dense<0.000000e+00> : vector<8x32xf32>
    %37 = tpu.matmul %35, %36, %cst_16 {dimension_numbers = #tpu.dot_dimension_numbers<[1], [0], [0], [1], [0, 0, 1, 1], [], []>} : vector<8x8xf32>, vector<8x32xf32>, vector<8x32xf32> -> vector<8x32xf32>
    %38 = vector.extract_strided_slice %19 {offsets = [0, 8], sizes = [8, 8], strides = [1, 1]} : vector<8x96xf32> to vector<8x8xf32>
    %39 = vector.extract_strided_slice %19 {offsets = [0, 40], sizes = [8, 8], strides = [1, 1]} : vector<8x96xf32> to vector<8x8xf32>
    %40 = vector.extract_strided_slice %19 {offsets = [0, 72], sizes = [8, 8], strides = [1, 1]} : vector<8x96xf32> to vector<8x8xf32>
    %cst_17 = arith.constant dense<0.000000e+00> : vector<8x8xf32>
    %41 = tpu.matmul %38, %39, %cst_17 {dimension_numbers = #tpu.dot_dimension_numbers<[1], [1], [0], [0], [0, 0, 1, 0], [], []>} : vector<8x8xf32>, vector<8x8xf32>, vector<8x8xf32> -> vector<8x8xf32>
    %cst_18 = arith.constant dense<0xFF800000> : vector<8xf32>
    %42 = vector.multi_reduction <maximumf>, %41, %cst_18 [1] : vector<8x8xf32> to vector<8xf32>
    %43 = vector.shape_cast %42 : vector<8xf32> to vector<8x1xf32>
    %44 = vector.broadcast %43 : vector<8x1xf32> to vector<8x8xf32>
    %45 = arith.subf %41, %44 : vector<8x8xf32>
    %46 = math.exp %45 : vector<8x8xf32>
    %cst_19 = arith.constant dense<0.000000e+00> : vector<8xf32>
    %47 = vector.multi_reduction <add>, %46, %cst_19 [1] : vector<8x8xf32> to vector<8xf32>
    %48 = vector.shape_cast %47 : vector<8xf32> to vector<8x1xf32>
    %49 = vector.broadcast %48 : vector<8x1xf32> to vector<8x8xf32>
    %50 = arith.divf %46, %49 : vector<8x8xf32>
    %cst_20 = arith.constant dense<0.000000e+00> : vector<8x8xf32>
    %51 = tpu.matmul %50, %40, %cst_20 {dimension_numbers = #tpu.dot_dimension_numbers<[1], [0], [0], [1], [0, 0, 1, 1], [], []>} : vector<8x8xf32>, vector<8x8xf32>, vector<8x8xf32> -> vector<8x8xf32>
    %52 = vector.extract_strided_slice %21 {offsets = [8, 0], sizes = [8, 32], strides = [1, 1]} : vector<32x32xf32> to vector<8x32xf32>
    %cst_21 = arith.constant dense<0.000000e+00> : vector<8x32xf32>
    %53 = tpu.matmul %51, %52, %cst_21 {dimension_numbers = #tpu.dot_dimension_numbers<[1], [0], [0], [1], [0, 0, 1, 1], [], []>} : vector<8x8xf32>, vector<8x32xf32>, vector<8x32xf32> -> vector<8x32xf32>
    %54 = arith.addf %37, %53 : vector<8x32xf32>
    %55 = vector.extract_strided_slice %19 {offsets = [0, 16], sizes = [8, 8], strides = [1, 1]} : vector<8x96xf32> to vector<8x8xf32>
    %56 = vector.extract_strided_slice %19 {offsets = [0, 48], sizes = [8, 8], strides = [1, 1]} : vector<8x96xf32> to vector<8x8xf32>
    %57 = vector.extract_strided_slice %19 {offsets = [0, 80], sizes = [8, 8], strides = [1, 1]} : vector<8x96xf32> to vector<8x8xf32>
    %cst_22 = arith.constant dense<0.000000e+00> : vector<8x8xf32>
    %58 = tpu.matmul %55, %56, %cst_22 {dimension_numbers = #tpu.dot_dimension_numbers<[1], [1], [0], [0], [0, 0, 1, 0], [], []>} : vector<8x8xf32>, vector<8x8xf32>, vector<8x8xf32> -> vector<8x8xf32>
    %cst_23 = arith.constant dense<0xFF800000> : vector<8xf32>
    %59 = vector.multi_reduction <maximumf>, %58, %cst_23 [1] : vector<8x8xf32> to vector<8xf32>
    %60 = vector.shape_cast %59 : vector<8xf32> to vector<8x1xf32>
    %61 = vector.broadcast %60 : vector<8x1xf32> to vector<8x8xf32>
    %62 = arith.subf %58, %61 : vector<8x8xf32>
    %63 = math.exp %62 : vector<8x8xf32>
    %cst_24 = arith.constant dense<0.000000e+00> : vector<8xf32>
    %64 = vector.multi_reduction <add>, %63, %cst_24 [1] : vector<8x8xf32> to vector<8xf32>
    %65 = vector.shape_cast %64 : vector<8xf32> to vector<8x1xf32>
    %66 = vector.broadcast %65 : vector<8x1xf32> to vector<8x8xf32>
    %67 = arith.divf %63, %66 : vector<8x8xf32>
    %cst_25 = arith.constant dense<0.000000e+00> : vector<8x8xf32>
    %68 = tpu.matmul %67, %57, %cst_25 {dimension_numbers = #tpu.dot_dimension_numbers<[1], [0], [0], [1], [0, 0, 1, 1], [], []>} : vector<8x8xf32>, vector<8x8xf32>, vector<8x8xf32> -> vector<8x8xf32>
    %69 = vector.extract_strided_slice %21 {offsets = [16, 0], sizes = [8, 32], strides = [1, 1]} : vector<32x32xf32> to vector<8x32xf32>
    %cst_26 = arith.constant dense<0.000000e+00> : vector<8x32xf32>
    %70 = tpu.matmul %68, %69, %cst_26 {dimension_numbers = #tpu.dot_dimension_numbers<[1], [0], [0], [1], [0, 0, 1, 1], [], []>} : vector<8x8xf32>, vector<8x32xf32>, vector<8x32xf32> -> vector<8x32xf32>
    %71 = arith.addf %54, %70 : vector<8x32xf32>
    %72 = vector.extract_strided_slice %19 {offsets = [0, 24], sizes = [8, 8], strides = [1, 1]} : vector<8x96xf32> to vector<8x8xf32>
    %73 = vector.extract_strided_slice %19 {offsets = [0, 56], sizes = [8, 8], strides = [1, 1]} : vector<8x96xf32> to vector<8x8xf32>
    %74 = vector.extract_strided_slice %19 {offsets = [0, 88], sizes = [8, 8], strides = [1, 1]} : vector<8x96xf32> to vector<8x8xf32>
    %cst_27 = arith.constant dense<0.000000e+00> : vector<8x8xf32>
    %75 = tpu.matmul %72, %73, %cst_27 {dimension_numbers = #tpu.dot_dimension_numbers<[1], [1], [0], [0], [0, 0, 1, 0], [], []>} : vector<8x8xf32>, vector<8x8xf32>, vector<8x8xf32> -> vector<8x8xf32>
    %cst_28 = arith.constant dense<0xFF800000> : vector<8xf32>
    %76 = vector.multi_reduction <maximumf>, %75, %cst_28 [1] : vector<8x8xf32> to vector<8xf32>
    %77 = vector.shape_cast %76 : vector<8xf32> to vector<8x1xf32>
    %78 = vector.broadcast %77 : vector<8x1xf32> to vector<8x8xf32>
    %79 = arith.subf %75, %78 : vector<8x8xf32>
    %80 = math.exp %79 : vector<8x8xf32>
    %cst_29 = arith.constant dense<0.000000e+00> : vector<8xf32>
    %81 = vector.multi_reduction <add>, %80, %cst_29 [1] : vector<8x8xf32> to vector<8xf32>
    %82 = vector.shape_cast %81 : vector<8xf32> to vector<8x1xf32>
    %83 = vector.broadcast %82 : vector<8x1xf32> to vector<8x8xf32>
    %84 = arith.divf %80, %83 : vector<8x8xf32>
    %cst_30 = arith.constant dense<0.000000e+00> : vector<8x8xf32>
    %85 = tpu.matmul %84, %74, %cst_30 {dimension_numbers = #tpu.dot_dimension_numbers<[1], [0], [0], [1], [0, 0, 1, 1], [], []>} : vector<8x8xf32>, vector<8x8xf32>, vector<8x8xf32> -> vector<8x8xf32>
    %86 = vector.extract_strided_slice %21 {offsets = [24, 0], sizes = [8, 32], strides = [1, 1]} : vector<32x32xf32> to vector<8x32xf32>
    %cst_31 = arith.constant dense<0.000000e+00> : vector<8x32xf32>
    %87 = tpu.matmul %85, %86, %cst_31 {dimension_numbers = #tpu.dot_dimension_numbers<[1], [0], [0], [1], [0, 0, 1, 1], [], []>} : vector<8x8xf32>, vector<8x32xf32>, vector<8x32xf32> -> vector<8x32xf32>
    %88 = arith.addf %71, %87 : vector<8x32xf32>
    %89 = vector.broadcast %9 : vector<1x32xf32> to vector<8x32xf32>
    %90 = arith.addf %88, %89 : vector<8x32xf32>
    %91 = arith.addf %4, %90 : vector<8x32xf32>
    %cst_32 = arith.constant dense<0.000000e+00> : vector<8xf32>
    %92 = vector.multi_reduction <add>, %91, %cst_32 [1] : vector<8x32xf32> to vector<8xf32>
    %93 = vector.shape_cast %92 : vector<8xf32> to vector<8x1xf32>
    %cst_33 = arith.constant 3.200000e+01 : f32
    %94 = vector.broadcast %cst_33 : f32 to vector<8x1xf32>
    %95 = arith.divf %93, %94 : vector<8x1xf32>
    %96 = vector.broadcast %95 : vector<8x1xf32> to vector<8x32xf32>
    %97 = arith.subf %91, %96 : vector<8x32xf32>
    %98 = arith.mulf %97, %97 : vector<8x32xf32>
    %cst_34 = arith.constant dense<0.000000e+00> : vector<8xf32>
    %99 = vector.multi_reduction <add>, %98, %cst_34 [1] : vector<8x32xf32> to vector<8xf32>
    %100 = vector.shape_cast %99 : vector<8xf32> to vector<8x1xf32>
    %cst_35 = arith.constant 3.200000e+01 : f32
    %101 = vector.broadcast %cst_35 : f32 to vector<8x1xf32>
    %102 = arith.divf %100, %101 : vector<8x1xf32>
    %103 = vector.broadcast %95 : vector<8x1xf32> to vector<8x32xf32>
    %104 = arith.subf %91, %103 : vector<8x32xf32>
    %cst_36 = arith.constant 9.99999974E-6 : f32
    %105 = vector.broadcast %cst_36 : f32 to vector<8x1xf32>
    %106 = arith.addf %102, %105 : vector<8x1xf32>
    %107 = math.rsqrt %106 : vector<8x1xf32>
    %108 = vector.broadcast %107 : vector<8x1xf32> to vector<8x32xf32>
    %109 = arith.mulf %104, %108 : vector<8x32xf32>
    %110 = vector.broadcast %10 : vector<1x32xf32> to vector<8x32xf32>
    %111 = arith.mulf %109, %110 : vector<8x32xf32>
    %112 = vector.broadcast %11 : vector<1x32xf32> to vector<8x32xf32>
    %113 = arith.addf %111, %112 : vector<8x32xf32>
    %c0_37 = arith.constant 0 : index
    %c0_38 = arith.constant 0 : index
    %c0_39 = arith.constant 0 : index
    %114 = vector.load %arg5[%c0_37, %c0_38, %c0_39] : memref<1x32x64xf32, #tpu.memory_space<vmem>>, vector<1x32x64xf32>
    %115 = vector.shape_cast %114 : vector<1x32x64xf32> to vector<32x64xf32>
    %cst_40 = arith.constant dense<0.000000e+00> : vector<8x64xf32>
    %116 = tpu.matmul %113, %115, %cst_40 {dimension_numbers = #tpu.dot_dimension_numbers<[1], [0], [0], [1], [0, 0, 1, 1], [], []>} : vector<8x32xf32>, vector<32x64xf32>, vector<8x64xf32> -> vector<8x64xf32>
    %117 = vector.broadcast %8 : vector<1x64xf32> to vector<8x64xf32>
    %118 = arith.addf %116, %117 : vector<8x64xf32>
    %cst_41 = arith.constant 0.000000e+00 : f32
    %119 = vector.broadcast %cst_41 : f32 to vector<8x64xf32>
    %120 = arith.maximumf %118, %119 : vector<8x64xf32>
    %c0_42 = arith.constant 0 : index
    %c0_43 = arith.constant 0 : index
    %c0_44 = arith.constant 0 : index
    %121 = vector.load %arg6[%c0_42, %c0_43, %c0_44] : memref<1x64x32xf32, #tpu.memory_space<vmem>>, vector<1x64x32xf32>
    %122 = vector.shape_cast %121 : vector<1x64x32xf32> to vector<64x32xf32>
    %cst_45 = arith.constant dense<0.000000e+00> : vector<8x32xf32>
    %123 = tpu.matmul %120, %122, %cst_45 {dimension_numbers = #tpu.dot_dimension_numbers<[1], [0], [0], [1], [0, 0, 1, 1], [], []>} : vector<8x64xf32>, vector<64x32xf32>, vector<8x32xf32> -> vector<8x32xf32>
    %124 = vector.broadcast %12 : vector<1x32xf32> to vector<8x32xf32>
    %125 = arith.addf %123, %124 : vector<8x32xf32>
    %126 = arith.addf %113, %125 : vector<8x32xf32>
    %cst_46 = arith.constant dense<0.000000e+00> : vector<8xf32>
    %127 = vector.multi_reduction <add>, %126, %cst_46 [1] : vector<8x32xf32> to vector<8xf32>
    %128 = vector.shape_cast %127 : vector<8xf32> to vector<8x1xf32>
    %cst_47 = arith.constant 3.200000e+01 : f32
    %129 = vector.broadcast %cst_47 : f32 to vector<8x1xf32>
    %130 = arith.divf %128, %129 : vector<8x1xf32>
    %131 = vector.broadcast %130 : vector<8x1xf32> to vector<8x32xf32>
    %132 = arith.subf %126, %131 : vector<8x32xf32>
    %133 = arith.mulf %132, %132 : vector<8x32xf32>
    %cst_48 = arith.constant dense<0.000000e+00> : vector<8xf32>
    %134 = vector.multi_reduction <add>, %133, %cst_48 [1] : vector<8x32xf32> to vector<8xf32>
    %135 = vector.shape_cast %134 : vector<8xf32> to vector<8x1xf32>
    %cst_49 = arith.constant 3.200000e+01 : f32
    %136 = vector.broadcast %cst_49 : f32 to vector<8x1xf32>
    %137 = arith.divf %135, %136 : vector<8x1xf32>
    %138 = vector.broadcast %130 : vector<8x1xf32> to vector<8x32xf32>
    %139 = arith.subf %126, %138 : vector<8x32xf32>
    %cst_50 = arith.constant 9.99999974E-6 : f32
    %140 = vector.broadcast %cst_50 : f32 to vector<8x1xf32>
    %141 = arith.addf %137, %140 : vector<8x1xf32>
    %142 = math.rsqrt %141 : vector<8x1xf32>
    %143 = vector.broadcast %142 : vector<8x1xf32> to vector<8x32xf32>
    %144 = arith.mulf %139, %143 : vector<8x32xf32>
    %145 = vector.broadcast %13 : vector<1x32xf32> to vector<8x32xf32>
    %146 = arith.mulf %144, %145 : vector<8x32xf32>
    %147 = vector.broadcast %14 : vector<1x32xf32> to vector<8x32xf32>
    %148 = arith.addf %146, %147 : vector<8x32xf32>
    %c0_51 = arith.constant 0 : index
    %c0_52 = arith.constant 0 : index
    %c0_53 = arith.constant 0 : index
    %149 = vector.load %arg8[%c0_51, %c0_52, %c0_53] : memref<1x8x32xf32, #tpu.memory_space<vmem>>, vector<1x8x32xf32>
    %150 = vector.shape_cast %149 : vector<1x8x32xf32> to vector<8x32xf32>
    %151 = vector.shape_cast %148 : vector<8x32xf32> to vector<1x8x32xf32>
    tpu.vector_store %arg8[%c0_51, %c0_52, %c0_53], %151 {strides = array<i32>} : memref<1x8x32xf32, #tpu.memory_space<vmem>>, vector<1x8x32xf32>,
    return
  }
  func.func @transform_0(%arg0: i32, %arg1: i32) -> (i32, i32, i32) {
    %c0_i32 = arith.constant 0 : i32
    %c0_i32_0 = arith.constant 0 : i32
    %c0_i32_1 = arith.constant 0 : i32
    return %arg0, %c0_i32, %c0_i32_0 : i32, i32, i32
  }
  func.func @transform_1(%arg0: i32, %arg1: i32) -> (i32, i32, i32) {
    %c0_i32 = arith.constant 0 : i32
    %c0_i32_0 = arith.constant 0 : i32
    %c0_i32_1 = arith.constant 0 : i32
    return %arg1, %c0_i32, %c0_i32_0 : i32, i32, i32
  }
  func.func @transform_2(%arg0: i32, %arg1: i32) -> (i32, i32, i32) {
    %c0_i32 = arith.constant 0 : i32
    %c0_i32_0 = arith.constant 0 : i32
    %c0_i32_1 = arith.constant 0 : i32
    return %arg1, %c0_i32, %c0_i32_0 : i32, i32, i32
  }
  func.func @transform_3(%arg0: i32, %arg1: i32) -> (i32, i32, i32) {
    %c0_i32 = arith.constant 0 : i32
    %c0_i32_0 = arith.constant 0 : i32
    %c0_i32_1 = arith.constant 0 : i32
    return %arg1, %c0_i32, %c0_i32_0 : i32, i32, i32
  }
  func.func @transform_4(%arg0: i32, %arg1: i32) -> (i32, i32, i32) {
    %c0_i32 = arith.constant 0 : i32
    %c0_i32_0 = arith.constant 0 : i32
    %c0_i32_1 = arith.constant 0 : i32
    return %arg1, %c0_i32, %c0_i32_0 : i32, i32, i32
  }
  func.func @transform_5(%arg0: i32, %arg1: i32) -> (i32, i32, i32) {
    %c0_i32 = arith.constant 0 : i32
    %c0_i32_0 = arith.constant 0 : i32
    %c0_i32_1 = arith.constant 0 : i32
    return %arg1, %c0_i32, %c0_i32_0 : i32, i32, i32
  }
  func.func @transform_6(%arg0: i32, %arg1: i32) -> (i32, i32, i32) {
    %c0_i32 = arith.constant 0 : i32
    %c0_i32_0 = arith.constant 0 : i32
    %c0_i32_1 = arith.constant 0 : i32
    return %arg0, %c0_i32, %c0_i32_0 : i32, i32, i32
  }
}

</mosaic_0001>

<llo_original>
// kernel: tpu_custom_call.1
$region0: #{tpu_custom_call.1}
  #allocation0 [shape = 'u32[]', space=smem, size = 0x4, offset = 0x4, fixed_abs, tag = 'smem constant byte address 0x4 - core index']
  #allocation1 [shape = 'u32[72,128]{1,0:T(1,128)}', space=vmem, size = 0x9000, scoped, tag = 'internal scratch']
  %s0 = inlined_call_operand.hbm [shape: f32[2,8,32], index: 0, kind: input, shape index: {}, may-alias: {0,6}]
  %s1 = inlined_call_operand.vmem [shape: f32[2,32,96], index: 1, kind: input, shape index: {}]
  %s2 = inlined_call_operand.vmem [shape: f32[2,32,32], index: 2, kind: input, shape index: {}]
  %s3 = inlined_call_operand.vmem [shape: f32[2,32,64], index: 3, kind: input, shape index: {}]
  %s4 = inlined_call_operand.vmem [shape: f32[2,64,32], index: 4, kind: input, shape index: {}]
  %s5 = inlined_call_operand.vmem [shape: f32[2,8,96], index: 5, kind: input, shape index: {}]
  %s6 = inlined_call_operand.hbm [shape: f32[2,8,32], index: 6, kind: output, shape index: {}, may-alias: {0,6}]
  %s7 = sld [smem:[#allocation0]]
  $region65: #{tpu_custom_call.1} parent=0
    _
  %s9 = ssub.s32 1, %s7
  %s10 = scalar_select 0, %s9, %s7
  $region1: #{tpu_custom_call.1} parent=0
    #allocation2 [shape = 'u8[8192]{0}', space=vmem, size = 0x2000, scoped, tag = 'input window, operand 0']
    #allocation3 [shape = 's32[2]{0}', space=sflag, size = 0x8, scoped, tag = 'scoped memory for tpu_custom_call.1']
    #allocation4 [shape = 's32[2]{0}', space=sflag, size = 0x8, scoped, tag = 'scoped memory for tpu_custom_call.1']
    #allocation5 [shape = 'u8[8192]{0}', space=vmem, size = 0x2000, scoped, tag = 'output window, operand 0']
    %11 = vsyncpa [#allocation3], 0
    %s12 = scalar_lea.sflag [#allocation3], 1
    %13 = vsyncpa %s12, 0
    %14 = vsyncpa [#allocation4], 0
    %s15 = scalar_lea.sflag [#allocation4], 1
    %16 = vsyncpa %s15, 0
    loop: start=0, step=1, limit=6
    $region2: #{tpu_custom_call.1} parent=1 // loop_pre_header
      _
    $region3: #{tpu_custom_call.1} parent=1 // loop_header
      %s18 = sphi 0, %s22
      %p19 = scmp.ge.s32.totalorder %s18, 6
      %s25 = sphi 0, %s37
      %s26 = sphi 0, %s33
      %s27 = sphi 0, %s25
      %s28 = sphi 0, %s26
      %s29 = sphi 0, %s27
      %s30 = sphi 0, %s28
      %s40 = sphi 0, %s42
      %s43 = sphi 0, %s40
      %s44 = sphi 0, %s43
      %s60 = sphi 0, %s44
      %s66 = sphi 0, %s68
      %s69 = sphi 0, %s66
      %s70 = sphi 0, %s69
      %s86 = sphi 0, %s70
      %s92 = sphi 0, %s94
      %s95 = sphi 0, %s92
      %s96 = sphi 0, %s95
      %s112 = sphi 0, %s96
      %s118 = sphi 0, %s120
      %s121 = sphi 0, %s118
      %s122 = sphi 0, %s121
      %s138 = sphi 0, %s122
      %s144 = sphi 0, %s146
      %s147 = sphi 0, %s144
      %s148 = sphi 0, %s147
      %s164 = sphi 0, %s148
      %s170 = sphi 0, %s172
      %s173 = sphi 0, %s170
      %s174 = sphi 0, %s173
      %s190 = sphi 0, %s174
      %s196 = sphi 0, %s198
      %s199 = sphi 0, %s196
      %s200 = sphi 0, %s199
      %s216 = sphi 0, %s200
    $region4: #{tpu_custom_call.1} parent=1 // loop_header_branch
      %21 = sbr.rel (%p19) target = $region8
    $region5: #{tpu_custom_call.1} parent=1 // loop_body
      %s23 = ssub.s32 %s18, 1
      %s24 = ssub.s32 %s18, 2
      %s31 = sadd.s32 1, %s26
      %p32 = scmp.ge.s32.totalorder %s31, 2
      %s33 = scalar_select %p32, 0, %s31
      %s34 = sadd.s32 1, %s25
      %s35 = scalar_select %p32, %s34, %s25
      %p36 = scmp.ge.s32.totalorder %s35, 2
      %s37 = scalar_select %p36, 0, %s35
      %s38 = ssub.s32 %s25, %s37
      %p39 = scmp.eq.s32.totalorder %s38, 0
      %s41 = sadd.s32 %s40, 1
      %s42 = scalar_select %p39, %s40, %s41
      %p45 = pneg %p39
      %p46 = scmp.eq.s32.totalorder %s18, 3
      %p47 = por %p45, %p46
      %p48 = scmp.ne.s32.totalorder %s40, %s43
      %p49 = scmp.eq.s32.totalorder %s18, 0
      %p50 = por %p48, %p49
      %p51 = scmp.ne.s32.totalorder %s40, %s43
      %p52 = scmp.eq.s32.totalorder %s23, 3
      %p53 = por %p51, %p52
      %p54 = scmp.ne.s32.totalorder %s43, %s44
      %p55 = scmp.eq.s32.totalorder %s23, 0
      %p56 = por %p54, %p55
      %p57 = scmp.ne.s32.totalorder %s43, %s44
      %p58 = scmp.eq.s32.totalorder %s24, 3
      %p59 = por %p57, %p58
      %p61 = scmp.ne.s32.totalorder %s44, %s60
      %p62 = scmp.eq.s32.totalorder %s24, 0
      %p63 = por %p61, %p62
      %s64 = ssub.s32 %s26, %s33
      %p65 = scmp.eq.s32.totalorder %s64, 0
      %s67 = sadd.s32 %s66, 1
      %s68 = scalar_select %p65, %s66, %s67
      %p71 = pneg %p65
      %p72 = scmp.eq.s32.totalorder %s18, 3
      %p73 = por %p71, %p72
      %p74 = scmp.ne.s32.totalorder %s66, %s69
      %p75 = scmp.eq.s32.totalorder %s18, 0
      %p76 = por %p74, %p75
      %p77 = scmp.ne.s32.totalorder %s66, %s69
      %p78 = scmp.eq.s32.totalorder %s23, 3
      %p79 = por %p77, %p78
      %p80 = scmp.ne.s32.totalorder %s69, %s70
      %p81 = scmp.eq.s32.totalorder %s23, 0
      %p82 = por %p80, %p81
      %p83 = scmp.ne.s32.totalorder %s69, %s70
      %p84 = scmp.eq.s32.totalorder %s24, 3
      %p85 = por %p83, %p84
      %p87 = scmp.ne.s32.totalorder %s70, %s86
      %p88 = scmp.eq.s32.totalorder %s24, 0
      %p89 = por %p87, %p88
      %s90 = ssub.s32 %s26, %s33
      %p91 = scmp.eq.s32.totalorder %s90, 0
      %s93 = sadd.s32 %s92, 1
      %s94 = scalar_select %p91, %s92, %s93
      %p97 = pneg %p91
      %p98 = scmp.eq.s32.totalorder %s18, 3
      %p99 = por %p97, %p98
      %p100 = scmp.ne.s32.totalorder %s92, %s95
      %p101 = scmp.eq.s32.totalorder %s18, 0
      %p102 = por %p100, %p101
      %p103 = scmp.ne.s32.totalorder %s92, %s95
      %p104 = scmp.eq.s32.totalorder %s23, 3
      %p105 = por %p103, %p104
      %p106 = scmp.ne.s32.totalorder %s95, %s96
      %p107 = scmp.eq.s32.totalorder %s23, 0
      %p108 = por %p106, %p107
      %p109 = scmp.ne.s32.totalorder %s95, %s96
      %p110 = scmp.eq.s32.totalorder %s24, 3
      %p111 = por %p109, %p110
      %p113 = scmp.ne.s32.totalorder %s96, %s112
      %p114 = scmp.eq.s32.totalorder %s24, 0
      %p115 = por %p113, %p114
      %s116 = ssub.s32 %s26, %s33
      %p117 = scmp.eq.s32.totalorder %s116, 0
      %s119 = sadd.s32 %s118, 1
      %s120 = scalar_select %p117, %s118, %s119
      %p123 = pneg %p117
      %p124 = scmp.eq.s32.totalorder %s18, 3
      %p125 = por %p123, %p124
      %p126 = scmp.ne.s32.totalorder %s118, %s121
      %p127 = scmp.eq.s32.totalorder %s18, 0
      %p128 = por %p126, %p127
      %p129 = scmp.ne.s32.totalorder %s118, %s121
      %p130 = scmp.eq.s32.totalorder %s23, 3
      %p131 = por %p129, %p130
      %p132 = scmp.ne.s32.totalorder %s121, %s122
      %p133 = scmp.eq.s32.totalorder %s23, 0
      %p134 = por %p132, %p133
      %p135 = scmp.ne.s32.totalorder %s121, %s122
      %p136 = scmp.eq.s32.totalorder %s24, 3
      %p137 = por %p135, %p136
      %p139 = scmp.ne.s32.totalorder %s122, %s138
      %p140 = scmp.eq.s32.totalorder %s24, 0
      %p141 = por %p139, %p140
      %s142 = ssub.s32 %s26, %s33
      %p143 = scmp.eq.s32.totalorder %s142, 0
      %s145 = sadd.s32 %s144, 1
      %s146 = scalar_select %p143, %s144, %s145
      %p149 = pneg %p143
      %p150 = scmp.eq.s32.totalorder %s18, 3
      %p151 = por %p149, %p150
      %p152 = scmp.ne.s32.totalorder %s144, %s147
      %p153 = scmp.eq.s32.totalorder %s18, 0
      %p154 = por %p152, %p153
      %p155 = scmp.ne.s32.totalorder %s144, %s147
      %p156 = scmp.eq.s32.totalorder %s23, 3
      %p157 = por %p155, %p156
      %p158 = scmp.ne.s32.totalorder %s147, %s148
      %p159 = scmp.eq.s32.totalorder %s23, 0
      %p160 = por %p158, %p159
      %p161 = scmp.ne.s32.totalorder %s147, %s148
      %p162 = scmp.eq.s32.totalorder %s24, 3
      %p163 = por %p161, %p162
      %p165 = scmp.ne.s32.totalorder %s148, %s164
      %p166 = scmp.eq.s32.totalorder %s24, 0
      %p167 = por %p165, %p166
      %s168 = ssub.s32 %s26, %s33
      %p169 = scmp.eq.s32.totalorder %s168, 0
      %s171 = sadd.s32 %s170, 1
      %s172 = scalar_select %p169, %s170, %s171
      %p175 = pneg %p169
      %p176 = scmp.eq.s32.totalorder %s18, 3
      %p177 = por %p175, %p176
      %p178 = scmp.ne.s32.totalorder %s170, %s173
      %p179 = scmp.eq.s32.totalorder %s18, 0
      %p180 = por %p178, %p179
      %p181 = scmp.ne.s32.totalorder %s170, %s173
      %p182 = scmp.eq.s32.totalorder %s23, 3
      %p183 = por %p181, %p182
      %p184 = scmp.ne.s32.totalorder %s173, %s174
      %p185 = scmp.eq.s32.totalorder %s23, 0
      %p186 = por %p184, %p185
      %p187 = scmp.ne.s32.totalorder %s173, %s174
      %p188 = scmp.eq.s32.totalorder %s24, 3
      %p189 = por %p187, %p188
      %p191 = scmp.ne.s32.totalorder %s174, %s190
      %p192 = scmp.eq.s32.totalorder %s24, 0
      %p193 = por %p191, %p192
      %s194 = ssub.s32 %s25, %s37
      %p195 = scmp.eq.s32.totalorder %s194, 0
      %s197 = sadd.s32 %s196, 1
      %s198 = scalar_select %p195, %s196, %s197
      %p201 = pneg %p195
      %p202 = scmp.eq.s32.totalorder %s18, 3
      %p203 = por %p201, %p202
      %p204 = scmp.ne.s32.totalorder %s196, %s199
      %p205 = scmp.eq.s32.totalorder %s18, 0
      %p206 = por %p204, %p205
      %p207 = scmp.ne.s32.totalorder %s196, %s199
      %p208 = scmp.eq.s32.totalorder %s23, 3
      %p209 = por %p207, %p208
      %p210 = scmp.ne.s32.totalorder %s199, %s200
      %p211 = scmp.eq.s32.totalorder %s23, 0
      %p212 = por %p210, %p211
      %p213 = scmp.ne.s32.totalorder %s199, %s200
      %p214 = scmp.eq.s32.totalorder %s24, 3
      %p215 = por %p213, %p214
      %p217 = scmp.ne.s32.totalorder %s200, %s216
      %p218 = scmp.eq.s32.totalorder %s24, 0
      %p219 = por %p217, %p218
      %p220 = scmp.le.s32.totalorder 1, %s18
      %p221 = scmp.lt.s32.totalorder %s18, 5
      %p222 = pnand %p220, %p221
      %p223 = pneg %p222
      // Predicated region
      $region9: #{tpu_custom_call.1} parent=5 // pred_check
        _
      $region10: #{tpu_custom_call.1} parent=5 // pred_check_branch
        %225 = sbr.rel (%p222) target = $region12
      $region11: #{tpu_custom_call.1} parent=5 // pred_region
        %s226 = ssub.s32 %s18, 1
      $region12: #{tpu_custom_call.1} parent=5 // pred_fallthru
        _
      %p227 = scmp.lt.s32.totalorder %s18, 4
      // Predicated region
      $region13: #{tpu_custom_call.1} parent=5 // pred_check
        %p228 = pneg %p227
      $region14: #{tpu_custom_call.1} parent=5 // pred_check_branch
        %230 = sbr.rel (%p228) target = $region16
      $region15: #{tpu_custom_call.1} parent=5 // pred_region
        // Predicated region
        $region17: #{tpu_custom_call.1} parent=15 // pred_check
          %p231 = pneg %p50
        $region18: #{tpu_custom_call.1} parent=15 // pred_check_branch
          %233 = sbr.rel (%p231) target = $region20
        $region19: #{tpu_custom_call.1} parent=15 // pred_region
          %s234 = sand.u32 %s40, 1
          %s235 = scalar_lea.sflag [#allocation3], %s234
          %s236 = sand.u32 %s40, 1
          %s237 = smul.addr %s236, 8
          %s238 = scalar_lea.vmem [#allocation2], %s237
          %240 = vsyncadd %s235, 0
          %s241 = smul.addr %s25, 8
          %s242 = scalar_lea.hbm %s0, %s241
          %s244 = sshll.u32 %s242, 4
          %s245 = int_to_ptr.hbm [resolvable:$true] %s244
          %s246 = sshll.u32 %s238, 4
          %s247 = int_to_ptr.vmem [resolvable:$true] %s246
          %249 = dma.hbm_to_vmem [thread:$0]  %s245, 128, %s247, %s235
        $region20: #{tpu_custom_call.1} parent=15 // pred_fallthru
          _
        // Predicated region
        $region21: #{tpu_custom_call.1} parent=15 // pred_check
          %p250 = pneg %p76
        $region22: #{tpu_custom_call.1} parent=15 // pred_check_branch
          %252 = sbr.rel (%p250) target = $region24
        $region23: #{tpu_custom_call.1} parent=15 // pred_region
          %p253 = scmp.lt.s32.totalorder %s26, 1
          %s254 = scalar_select %p253, %s26, 1
          %s255 = smul.addr %s254, 4
          %s256 = smul.addr %s255, 8
          %s257 = scalar_lea.vmem %s1, %s256
        $region24: #{tpu_custom_call.1} parent=15 // pred_fallthru
          _
        // Predicated region
        $region25: #{tpu_custom_call.1} parent=15 // pred_check
          %p258 = pneg %p102
        $region26: #{tpu_custom_call.1} parent=15 // pred_check_branch
          %260 = sbr.rel (%p258) target = $region28
        $region27: #{tpu_custom_call.1} parent=15 // pred_region
          %p261 = scmp.lt.s32.totalorder %s26, 1
          %s262 = scalar_select %p261, %s26, 1
          %s263 = smul.addr %s262, 4
          %s264 = smul.addr %s263, 8
          %s265 = scalar_lea.vmem %s2, %s264
        $region28: #{tpu_custom_call.1} parent=15 // pred_fallthru
          _
        // Predicated region
        $region29: #{tpu_custom_call.1} parent=15 // pred_check
          %p266 = pneg %p128
        $region30: #{tpu_custom_call.1} parent=15 // pred_check_branch
          %268 = sbr.rel (%p266) target = $region32
        $region31: #{tpu_custom_call.1} parent=15 // pred_region
          %p269 = scmp.lt.s32.totalorder %s26, 1
          %s270 = scalar_select %p269, %s26, 1
          %s271 = smul.addr %s270, 4
          %s272 = smul.addr %s271, 8
          %s273 = scalar_lea.vmem %s3, %s272
        $region32: #{tpu_custom_call.1} parent=15 // pred_fallthru
          _
        // Predicated region
        $region33: #{tpu_custom_call.1} parent=15 // pred_check
          %p274 = pneg %p154
        $region34: #{tpu_custom_call.1} parent=15 // pred_check_branch
          %276 = sbr.rel (%p274) target = $region36
        $region35: #{tpu_custom_call.1} parent=15 // pred_region
          %p277 = scmp.lt.s32.totalorder %s26, 1
          %s278 = scalar_select %p277, %s26, 1
          %s279 = smul.addr %s278, 8
          %s280 = smul.addr %s279, 8
          %s281 = scalar_lea.vmem %s4, %s280
        $region36: #{tpu_custom_call.1} parent=15 // pred_fallthru
          _
        // Predicated region
        $region37: #{tpu_custom_call.1} parent=15 // pred_check
          %p282 = pneg %p180
        $region38: #{tpu_custom_call.1} parent=15 // pred_check_branch
          %284 = sbr.rel (%p282) target = $region40
        $region39: #{tpu_custom_call.1} parent=15 // pred_region
          %p285 = scmp.lt.s32.totalorder %s26, 1
          %s286 = scalar_select %p285, %s26, 1
          %s287 = smul.addr %s286, 8
          %s288 = scalar_lea.vmem %s5, %s287
        $region40: #{tpu_custom_call.1} parent=15 // pred_fallthru
          _
      $region16: #{tpu_custom_call.1} parent=5 // pred_fallthru
        _
      %p289 = scmp.le.s32.totalorder 1, %s18
      %p290 = scmp.lt.s32.totalorder %s18, 5
      %p291 = pnand %p289, %p290
      %p292 = pneg %p291
      // Predicated region
      $region41: #{tpu_custom_call.1} parent=5 // pred_check
        _
      $region42: #{tpu_custom_call.1} parent=5 // pred_check_branch
        %294 = sbr.rel (%p291) target = $region44
      $region43: #{tpu_custom_call.1} parent=5 // pred_region
        %s295 = ssub.s32 %s18, 1
        %s296 = sand.u32 %s43, 1
        %s297 = scalar_lea.sflag [#allocation3], %s296
        %s298 = sand.u32 %s43, 1
        %s299 = smul.addr %s298, 8
        %s300 = scalar_lea.vmem [#allocation2], %s299
        // Predicated region
        $region45: #{tpu_custom_call.1} parent=43 // pred_check
          %p301 = pneg %p56
        $region46: #{tpu_custom_call.1} parent=43 // pred_check_branch
          %303 = sbr.rel (%p301) target = $region48
        $region47: #{tpu_custom_call.1} parent=43 // pred_region
          %305 = dma.done %s297, 128
        $region48: #{tpu_custom_call.1} parent=43 // pred_fallthru
          _
        %s306 = sand.u32 %s43, 1
        %s307 = scalar_lea.sflag [#allocation3], %s306
        %s308 = sand.u32 %s43, 1
        %s309 = smul.addr %s308, 8
        %s310 = scalar_lea.vmem [#allocation2], %s309
        %p311 = pneg %p56
        %p312 = pneg %p53
        %p313 = scmp.lt.s32.totalorder %s28, 1
        %s314 = scalar_select %p313, %s28, 1
        %s315 = smul.addr %s314, 4
        %s316 = smul.addr %s315, 8
        %s317 = scalar_lea.vmem %s1, %s316
        %p318 = pneg %p82
        %p319 = pneg %p79
        %p320 = scmp.lt.s32.totalorder %s28, 1
        %s321 = scalar_select %p320, %s28, 1
        %s322 = smul.addr %s321, 4
        %s323 = smul.addr %s322, 8
        %s324 = scalar_lea.vmem %s2, %s323
        %p325 = pneg %p108
        %p326 = pneg %p105
        %p327 = scmp.lt.s32.totalorder %s28, 1
        %s328 = scalar_select %p327, %s28, 1
        %s329 = smul.addr %s328, 4
        %s330 = smul.addr %s329, 8
        %s331 = scalar_lea.vmem %s3, %s330
        %p332 = pneg %p134
        %p333 = pneg %p131
        %p334 = scmp.lt.s32.totalorder %s28, 1
        %s335 = scalar_select %p334, %s28, 1
        %s336 = smul.addr %s335, 8
        %s337 = smul.addr %s336, 8
        %s338 = scalar_lea.vmem %s4, %s337
        %p339 = pneg %p160
        %p340 = pneg %p157
        %p341 = scmp.lt.s32.totalorder %s28, 1
        %s342 = scalar_select %p341, %s28, 1
        %s343 = smul.addr %s342, 8
        %s344 = scalar_lea.vmem %s5, %s343
        %p345 = pneg %p186
        %p346 = pneg %p183
        %p347 = pneg %p212
        %p348 = pneg %p209
        %s349 = sand.u32 %s199, 1
        %s350 = scalar_lea.sflag [#allocation4], %s349
        %s351 = sand.u32 %s199, 1
        %s352 = smul.addr %s351, 8
        %s353 = scalar_lea.vmem [#allocation5], %s352
        %p354 = scmp.lt.s32.totalorder %s28, 1
        %s355 = scalar_select %p354, %s28, 1
        %s356 = smul.addr %s355, 4
        %s357 = smul.addr %s356, 8
        %s358 = scalar_lea.vmem %s1, %s357
        %p359 = scmp.lt.s32.totalorder %s28, 1
        %s360 = scalar_select %p359, %s28, 1
        %s361 = smul.addr %s360, 4
        %s362 = smul.addr %s361, 8
        %s363 = scalar_lea.vmem %s2, %s362
        %p364 = scmp.lt.s32.totalorder %s28, 1
        %s365 = scalar_select %p364, %s28, 1
        %s366 = smul.addr %s365, 4
        %s367 = smul.addr %s366, 8
        %s368 = scalar_lea.vmem %s3, %s367
        %p369 = scmp.lt.s32.totalorder %s28, 1
        %s370 = scalar_select %p369, %s28, 1
        %s371 = smul.addr %s370, 8
        %s372 = smul.addr %s371, 8
        %s373 = scalar_lea.vmem %s4, %s372
        %p374 = scmp.lt.s32.totalorder %s28, 1
        %s375 = scalar_select %p374, %s28, 1
        %s376 = smul.addr %s375, 8
        %s377 = scalar_lea.vmem %s5, %s376
        %p378 = scmp.eq.s32.totalorder %s28, 0
        // Predicated region
        $region49: #{tpu_custom_call.1} parent=43 // pred_check
          %p379 = pneg %p378
        $region50: #{tpu_custom_call.1} parent=43 // pred_check_branch
          %381 = sbr.rel (%p379) target = $region52
        $region51: #{tpu_custom_call.1} parent=43 // pred_region
          %v382 = vld [vmem:[%s300] sm:$0xff]
          %vm383 = vcmask 261120
          %384 = vst.msk [vmem:[%s353] sm:$0xff] %vm383, %v382
        $region52: #{tpu_custom_call.1} parent=43 // pred_fallthru
          _
        %v385 = vld [vmem:[%s353] sm:$0xff]
        %v386 = vld [vmem:[%s377] sm:$0xff]
        %v387 = vld [vmem:[%s358] sm:$0xff]
        %v388 = vld [vmem:[%s358 + $0x8] sm:$0xff]
        %v389 = vld [vmem:[%s358 + $0x10] sm:$0xff]
        %v390 = vld [vmem:[%s358 + $0x18] sm:$0xff]
        %v391 = vperm.slane %v386, 0
        %vm392 = vcmask 261120
        %v394 = vsel %vm392, %v385, 0
        %396 = vmatpush.msra.mxu0 0.0
        %397 = vmatpush.msra.mxu0 0.0
        %398 = vmatpush.msra.mxu0 0.0
        %399 = vmatpush.msra.mxu0 0.0
        %400 = vmatpush.msra.mxu0 0.0
        %401 = vmatpush.msra.mxu0 0.0
        %402 = vmatpush.msra.mxu0 0.0
        %403 = vmatpush.msra.mxu0 0.0
        %404 = vmatpush.msra.mxu0 0.0
        %405 = vmatpush.msra.mxu0 0.0
        %406 = vmatpush.msra.mxu0 0.0
        %407 = vmatpush.msra.mxu0 0.0
        %408 = vmatpush.msra.mxu0 %v390
        %409 = vmatpush.msra.mxu0 %v389
        %410 = vmatpush.msra.mxu0 %v388
        %411 = vmatpush.msra.mxu0 %v387
        %412 = vmatmul.f32.gmra.mxu0 %v394
        %v413 = vpop.f32.mrf.mxu0
        %v414 = vadd.f32 %v391, %v413
        %415 = vdwg.mxu0
        %v416 = vld [vmem:[%s363] sm:$0xff]
        %v417 = vld [vmem:[%s363 + $0x8] sm:$0xff]
        %v418 = vld [vmem:[%s363 + $0x10] sm:$0xff]
        %v419 = vld [vmem:[%s363 + $0x18] sm:$0xff]
        %421 = vrot.lane.b32.xlu0 %v414, 96
        %v422 = vpop.permute.xlu0 %421
        %vm423 = vcmask 64512
        %v424 = vsel %vm423, %v414, 0
        %v426 = vsel %vm423, %v422, 0
        %428 = vmatpush.xpose.msra.mxu0 0.0
        %429 = vmatpush.xpose.msra.mxu0 0.0
        %430 = vmatpush.xpose.msra.mxu0 0.0
        %431 = vmatpush.xpose.msra.mxu0 0.0
        %432 = vmatpush.xpose.msra.mxu0 0.0
        %433 = vmatpush.xpose.msra.mxu0 0.0
        %434 = vmatpush.xpose.msra.mxu0 0.0
        %435 = vmatpush.xpose.msra.mxu0 0.0
        %436 = vmatpush.xpose.msra.mxu0 0.0
        %437 = vmatpush.xpose.msra.mxu0 0.0
        %438 = vmatpush.xpose.msra.mxu0 0.0
        %439 = vmatpush.xpose.msra.mxu0 0.0
        %440 = vmatpush.xpose.msra.mxu0 0.0
        %441 = vmatpush.xpose.msra.mxu0 0.0
        %442 = vmatpush.xpose.msra.mxu0 0.0
        %443 = vmatpush.xpose.msra.mxu0 %v426
        %444 = vmatmul.f32.gmra.mxu0 %v424
        %v445 = vpop.f32.mrf.mxu0
        %v446 = vadd.f32 0.0, %v445
        %447 = vdwg.mxu0
        %v448 = vsel %vm423, %v446, -inf
        %449 = vmax.xlane.f32.xlu0 %v448
        %v450 = vpop.xlane.xlu0 %449
        %v451 = vsub.f32 %v446, %v450
        %v452 = vmul.f32 %v451, 1.442695
        %v453 = vpow.pop %v452
        %v454 = vsel %vm423, %v453, 0.0
        %455 = vadd.xlane.f32.xlu0 %v454
        %v456 = vpop.xlane.xlu0 %455
        %v457 = vrcp.pop %v456
        %v458 = vmul.f32 %v456, %v457
        %v459 = vsub.f32 1.0, %v458
        %v460 = vmul.f32 %v457, %v459
        %v461 = vadd.f32 %v457, %v460
        %vm462 = vweird.f32 %v456
        %vm463 = vweird.f32 %v457
        %vm464 = vmor %vm462, %vm463
        %v465 = vsel %vm464, %v457, %v461
        %v466 = vand.u32 2147483647, %v456
        %vm467 = vcmp.eq.f32.partialorder %v466, 8.507059e+37
        %v468 = vand.u32 %v456, 2147483648
        %v469 = vor.u32 1.1754944e-38, %v468
        %v470 = vsel %vm467, %v469, %v465
        %v471 = vmul.f32 %v453, %v470
        %472 = vrot.lane.b32.xlu0 %v414, 64
        %v473 = vpop.permute.xlu0 %472
        %v476 = vsel %vm423, %v471, 0
        %478 = vmatpush.msra.mxu0 0.0
        %479 = vmatpush.msra.mxu0 0.0
        %480 = vmatpush.msra.mxu0 0.0
        %481 = vmatpush.msra.mxu0 0.0
        %482 = vmatpush.msra.mxu0 0.0
        %483 = vmatpush.msra.mxu0 0.0
        %484 = vmatpush.msra.mxu0 0.0
        %485 = vmatpush.msra.mxu0 0.0
        %486 = vmatpush.msra.mxu0 0.0
        %487 = vmatpush.msra.mxu0 0.0
        %488 = vmatpush.msra.mxu0 0.0
        %489 = vmatpush.msra.mxu0 0.0
        %490 = vmatpush.msra.mxu0 0.0
        %491 = vmatpush.msra.mxu0 0.0
        %492 = vmatpush.msra.mxu0 0.0
        %493 = vmatpush.msra.mxu0 %v473
        %494 = vmatmul.f32.gmra.mxu0 %v476
        %v495 = vpop.f32.mrf.mxu0
        %v496 = vadd.f32 0.0, %v495
        %497 = vdwg.mxu0
        %498 = vrot.lane.b32.xlu0 %v414, 120
        %v499 = vpop.permute.xlu0 %498
        %500 = vrot.lane.b32.xlu0 %v414, 88
        %v501 = vpop.permute.xlu0 %500
        %v502 = vsel %vm423, %v499, 0
        %v504 = vsel %vm423, %v501, 0
        %506 = vmatpush.xpose.msra.mxu0 0.0
        %507 = vmatpush.xpose.msra.mxu0 0.0
        %508 = vmatpush.xpose.msra.mxu0 0.0
        %509 = vmatpush.xpose.msra.mxu0 0.0
        %510 = vmatpush.xpose.msra.mxu0 0.0
        %511 = vmatpush.xpose.msra.mxu0 0.0
        %512 = vmatpush.xpose.msra.mxu0 0.0
        %513 = vmatpush.xpose.msra.mxu0 0.0
        %514 = vmatpush.xpose.msra.mxu0 0.0
        %515 = vmatpush.xpose.msra.mxu0 0.0
        %516 = vmatpush.xpose.msra.mxu0 0.0
        %517 = vmatpush.xpose.msra.mxu0 0.0
        %518 = vmatpush.xpose.msra.mxu0 0.0
        %519 = vmatpush.xpose.msra.mxu0 0.0
        %520 = vmatpush.xpose.msra.mxu0 0.0
        %521 = vmatpush.xpose.msra.mxu0 %v504
        %522 = vmatmul.f32.gmra.mxu0 %v502
        %v523 = vpop.f32.mrf.mxu0
        %v524 = vadd.f32 0.0, %v523
        %525 = vdwg.mxu0
        %v526 = vsel %vm423, %v524, -inf
        %527 = vmax.xlane.f32.xlu0 %v526
        %v528 = vpop.xlane.xlu0 %527
        %v529 = vsub.f32 %v524, %v528
        %v530 = vmul.f32 %v529, 1.442695
        %v531 = vpow.pop %v530
        %v532 = vsel %vm423, %v531, 0.0
        %533 = vadd.xlane.f32.xlu0 %v532
        %v534 = vpop.xlane.xlu0 %533
        %v535 = vrcp.pop %v534
        %v536 = vmul.f32 %v534, %v535
        %v537 = vsub.f32 1.0, %v536
        %v538 = vmul.f32 %v535, %v537
        %v539 = vadd.f32 %v535, %v538
        %vm540 = vweird.f32 %v534
        %vm541 = vweird.f32 %v535
        %vm542 = vmor %vm540, %vm541
        %v543 = vsel %vm542, %v535, %v539
        %v544 = vand.u32 2147483647, %v534
        %vm545 = vcmp.eq.f32.partialorder %v544, 8.507059e+37
        %v546 = vand.u32 %v534, 2147483648
        %v547 = vor.u32 1.1754944e-38, %v546
        %v548 = vsel %vm545, %v547, %v543
        %v549 = vmul.f32 %v531, %v548
        %550 = vrot.lane.b32.xlu0 %v414, 56
        %v551 = vpop.permute.xlu0 %550
        %v554 = vsel %vm423, %v549, 0
        %556 = vmatpush.msra.mxu0 0.0
        %557 = vmatpush.msra.mxu0 0.0
        %558 = vmatpush.msra.mxu0 0.0
        %559 = vmatpush.msra.mxu0 0.0
        %560 = vmatpush.msra.mxu0 0.0
        %561 = vmatpush.msra.mxu0 0.0
        %562 = vmatpush.msra.mxu0 0.0
        %563 = vmatpush.msra.mxu0 0.0
        %564 = vmatpush.msra.mxu0 0.0
        %565 = vmatpush.msra.mxu0 0.0
        %566 = vmatpush.msra.mxu0 0.0
        %567 = vmatpush.msra.mxu0 0.0
        %568 = vmatpush.msra.mxu0 0.0
        %569 = vmatpush.msra.mxu0 0.0
        %570 = vmatpush.msra.mxu0 0.0
        %571 = vmatpush.msra.mxu0 %v551
        %572 = vmatmul.f32.gmra.mxu0 %v554
        %v573 = vpop.f32.mrf.mxu0
        %v574 = vadd.f32 0.0, %v573
        %575 = vdwg.mxu0
        %v577 = vsel %vm423, %v574, 0
        %579 = vmatpush.msra.mxu0 0.0
        %580 = vmatpush.msra.mxu0 0.0
        %581 = vmatpush.msra.mxu0 0.0
        %582 = vmatpush.msra.mxu0 0.0
        %583 = vmatpush.msra.mxu0 0.0
        %584 = vmatpush.msra.mxu0 0.0
        %585 = vmatpush.msra.mxu0 0.0
        %586 = vmatpush.msra.mxu0 0.0
        %587 = vmatpush.msra.mxu0 0.0
        %588 = vmatpush.msra.mxu0 0.0
        %589 = vmatpush.msra.mxu0 0.0
        %590 = vmatpush.msra.mxu0 0.0
        %591 = vmatpush.msra.mxu0 0.0
        %592 = vmatpush.msra.mxu0 0.0
        %593 = vmatpush.msra.mxu0 0.0
        %594 = vmatpush.msra.mxu0 %v417
        %595 = vmatmul.f32.gmra.mxu0 %v577
        %v596 = vpop.f32.mrf.mxu0
        %v597 = vadd.f32 0.0, %v596
        %598 = vdwg.mxu0
        %v600 = vsel %vm423, %v496, 0
        %602 = vmatpush.msra.mxu0 0.0
        %603 = vmatpush.msra.mxu0 0.0
        %604 = vmatpush.msra.mxu0 0.0
        %605 = vmatpush.msra.mxu0 0.0
        %606 = vmatpush.msra.mxu0 0.0
        %607 = vmatpush.msra.mxu0 0.0
        %608 = vmatpush.msra.mxu0 0.0
        %609 = vmatpush.msra.mxu0 0.0
        %610 = vmatpush.msra.mxu0 0.0
        %611 = vmatpush.msra.mxu0 0.0
        %612 = vmatpush.msra.mxu0 0.0
        %613 = vmatpush.msra.mxu0 0.0
        %614 = vmatpush.msra.mxu0 0.0
        %615 = vmatpush.msra.mxu0 0.0
        %616 = vmatpush.msra.mxu0 0.0
        %617 = vmatpush.msra.mxu0 %v416
        %618 = vmatmul.f32.gmra.mxu0 %v600
        %v619 = vpop.f32.mrf.mxu0
        %v620 = vadd.f32 %v597, %v619
        %621 = vdwg.mxu0
        %622 = vrot.lane.b32.xlu0 %v414, 112
        %v623 = vpop.permute.xlu0 %622
        %624 = vrot.lane.b32.xlu0 %v414, 80
        %v625 = vpop.permute.xlu0 %624
        %v626 = vsel %vm423, %v623, 0
        %v628 = vsel %vm423, %v625, 0
        %630 = vmatpush.xpose.msra.mxu0 0.0
        %631 = vmatpush.xpose.msra.mxu0 0.0
        %632 = vmatpush.xpose.msra.mxu0 0.0
        %633 = vmatpush.xpose.msra.mxu0 0.0
        %634 = vmatpush.xpose.msra.mxu0 0.0
        %635 = vmatpush.xpose.msra.mxu0 0.0
        %636 = vmatpush.xpose.msra.mxu0 0.0
        %637 = vmatpush.xpose.msra.mxu0 0.0
        %638 = vmatpush.xpose.msra.mxu0 0.0
        %639 = vmatpush.xpose.msra.mxu0 0.0
        %640 = vmatpush.xpose.msra.mxu0 0.0
        %641 = vmatpush.xpose.msra.mxu0 0.0
        %642 = vmatpush.xpose.msra.mxu0 0.0
        %643 = vmatpush.xpose.msra.mxu0 0.0
        %644 = vmatpush.xpose.msra.mxu0 0.0
        %645 = vmatpush.xpose.msra.mxu0 %v628
        %646 = vmatmul.f32.gmra.mxu0 %v626
        %v647 = vpop.f32.mrf.mxu0
        %v648 = vadd.f32 0.0, %v647
        %649 = vdwg.mxu0
        %v650 = vsel %vm423, %v648, -inf
        %651 = vmax.xlane.f32.xlu0 %v650
        %v652 = vpop.xlane.xlu0 %651
        %v653 = vsub.f32 %v648, %v652
        %v654 = vmul.f32 %v653, 1.442695
        %v655 = vpow.pop %v654
        %v656 = vsel %vm423, %v655, 0.0
        %657 = vadd.xlane.f32.xlu0 %v656
        %v658 = vpop.xlane.xlu0 %657
        %v659 = vrcp.pop %v658
        %v660 = vmul.f32 %v658, %v659
        %v661 = vsub.f32 1.0, %v660
        %v662 = vmul.f32 %v659, %v661
        %v663 = vadd.f32 %v659, %v662
        %vm664 = vweird.f32 %v658
        %vm665 = vweird.f32 %v659
        %vm666 = vmor %vm664, %vm665
        %v667 = vsel %vm666, %v659, %v663
        %v668 = vand.u32 2147483647, %v658
        %vm669 = vcmp.eq.f32.partialorder %v668, 8.507059e+37
        %v670 = vand.u32 %v658, 2147483648
        %v671 = vor.u32 1.1754944e-38, %v670
        %v672 = vsel %vm669, %v671, %v667
        %v673 = vmul.f32 %v655, %v672
        %674 = vrot.lane.b32.xlu0 %v414, 48
        %v675 = vpop.permute.xlu0 %674
        %v678 = vsel %vm423, %v673, 0
        %680 = vmatpush.msra.mxu0 0.0
        %681 = vmatpush.msra.mxu0 0.0
        %682 = vmatpush.msra.mxu0 0.0
        %683 = vmatpush.msra.mxu0 0.0
        %684 = vmatpush.msra.mxu0 0.0
        %685 = vmatpush.msra.mxu0 0.0
        %686 = vmatpush.msra.mxu0 0.0
        %687 = vmatpush.msra.mxu0 0.0
        %688 = vmatpush.msra.mxu0 0.0
        %689 = vmatpush.msra.mxu0 0.0
        %690 = vmatpush.msra.mxu0 0.0
        %691 = vmatpush.msra.mxu0 0.0
        %692 = vmatpush.msra.mxu0 0.0
        %693 = vmatpush.msra.mxu0 0.0
        %694 = vmatpush.msra.mxu0 0.0
        %695 = vmatpush.msra.mxu0 %v675
        %696 = vmatmul.f32.gmra.mxu0 %v678
        %v697 = vpop.f32.mrf.mxu0
        %v698 = vadd.f32 0.0, %v697
        %699 = vdwg.mxu0
        %v701 = vsel %vm423, %v698, 0
        %703 = vmatpush.msra.mxu0 0.0
        %704 = vmatpush.msra.mxu0 0.0
        %705 = vmatpush.msra.mxu0 0.0
        %706 = vmatpush.msra.mxu0 0.0
        %707 = vmatpush.msra.mxu0 0.0
        %708 = vmatpush.msra.mxu0 0.0
        %709 = vmatpush.msra.mxu0 0.0
        %710 = vmatpush.msra.mxu0 0.0
        %711 = vmatpush.msra.mxu0 0.0
        %712 = vmatpush.msra.mxu0 0.0
        %713 = vmatpush.msra.mxu0 0.0
        %714 = vmatpush.msra.mxu0 0.0
        %715 = vmatpush.msra.mxu0 0.0
        %716 = vmatpush.msra.mxu0 0.0
        %717 = vmatpush.msra.mxu0 0.0
        %718 = vmatpush.msra.mxu0 %v418
        %719 = vmatmul.f32.gmra.mxu0 %v701
        %v720 = vpop.f32.mrf.mxu0
        %v721 = vadd.f32 0.0, %v720
        %722 = vdwg.mxu0
        %v723 = vadd.f32 %v620, %v721
        %724 = vrot.lane.b32.xlu0 %v414, 104
        %v725 = vpop.permute.xlu0 %724
        %726 = vrot.lane.b32.xlu0 %v414, 72
        %v727 = vpop.permute.xlu0 %726
        %v728 = vsel %vm423, %v725, 0
        %v730 = vsel %vm423, %v727, 0
        %732 = vmatpush.xpose.msra.mxu0 0.0
        %733 = vmatpush.xpose.msra.mxu0 0.0
        %734 = vmatpush.xpose.msra.mxu0 0.0
        %735 = vmatpush.xpose.msra.mxu0 0.0
        %736 = vmatpush.xpose.msra.mxu0 0.0
        %737 = vmatpush.xpose.msra.mxu0 0.0
        %738 = vmatpush.xpose.msra.mxu0 0.0
        %739 = vmatpush.xpose.msra.mxu0 0.0
        %740 = vmatpush.xpose.msra.mxu0 0.0
        %741 = vmatpush.xpose.msra.mxu0 0.0
        %742 = vmatpush.xpose.msra.mxu0 0.0
        %743 = vmatpush.xpose.msra.mxu0 0.0
        %744 = vmatpush.xpose.msra.mxu0 0.0
        %745 = vmatpush.xpose.msra.mxu0 0.0
        %746 = vmatpush.xpose.msra.mxu0 0.0
        %747 = vmatpush.xpose.msra.mxu0 %v730
        %748 = vmatmul.f32.gmra.mxu0 %v728
        %v749 = vpop.f32.mrf.mxu0
        %v750 = vadd.f32 0.0, %v749
        %751 = vdwg.mxu0
        %v752 = vsel %vm423, %v750, -inf
        %753 = vmax.xlane.f32.xlu0 %v752
        %v754 = vpop.xlane.xlu0 %753
        %v755 = vsub.f32 %v750, %v754
        %v756 = vmul.f32 %v755, 1.442695
        %v757 = vpow.pop %v756
        %v758 = vsel %vm423, %v757, 0.0
        %759 = vadd.xlane.f32.xlu0 %v758
        %v760 = vpop.xlane.xlu0 %759
        %v761 = vrcp.pop %v760
        %v762 = vmul.f32 %v760, %v761
        %v763 = vsub.f32 1.0, %v762
        %v764 = vmul.f32 %v761, %v763
        %v765 = vadd.f32 %v761, %v764
        %vm766 = vweird.f32 %v760
        %vm767 = vweird.f32 %v761
        %vm768 = vmor %vm766, %vm767
        %v769 = vsel %vm768, %v761, %v765
        %v770 = vand.u32 2147483647, %v760
        %vm771 = vcmp.eq.f32.partialorder %v770, 8.507059e+37
        %v772 = vand.u32 %v760, 2147483648
        %v773 = vor.u32 1.1754944e-38, %v772
        %v774 = vsel %vm771, %v773, %v769
        %v775 = vmul.f32 %v757, %v774
        %776 = vrot.lane.b32.xlu0 %v414, 40
        %v777 = vpop.permute.xlu0 %776
        %v780 = vsel %vm423, %v775, 0
        %782 = vmatpush.msra.mxu0 0.0
        %783 = vmatpush.msra.mxu0 0.0
        %784 = vmatpush.msra.mxu0 0.0
        %785 = vmatpush.msra.mxu0 0.0
        %786 = vmatpush.msra.mxu0 0.0
        %787 = vmatpush.msra.mxu0 0.0
        %788 = vmatpush.msra.mxu0 0.0
        %789 = vmatpush.msra.mxu0 0.0
        %790 = vmatpush.msra.mxu0 0.0
        %791 = vmatpush.msra.mxu0 0.0
        %792 = vmatpush.msra.mxu0 0.0
        %793 = vmatpush.msra.mxu0 0.0
        %794 = vmatpush.msra.mxu0 0.0
        %795 = vmatpush.msra.mxu0 0.0
        %796 = vmatpush.msra.mxu0 0.0
        %797 = vmatpush.msra.mxu0 %v777
        %798 = vmatmul.f32.gmra.mxu0 %v780
        %v799 = vpop.f32.mrf.mxu0
        %v800 = vadd.f32 0.0, %v799
        %801 = vdwg.mxu0
        %v803 = vsel %vm423, %v800, 0
        %805 = vmatpush.msra.mxu0 0.0
        %806 = vmatpush.msra.mxu0 0.0
        %807 = vmatpush.msra.mxu0 0.0
        %808 = vmatpush.msra.mxu0 0.0
        %809 = vmatpush.msra.mxu0 0.0
        %810 = vmatpush.msra.mxu0 0.0
        %811 = vmatpush.msra.mxu0 0.0
        %812 = vmatpush.msra.mxu0 0.0
        %813 = vmatpush.msra.mxu0 0.0
        %814 = vmatpush.msra.mxu0 0.0
        %815 = vmatpush.msra.mxu0 0.0
        %816 = vmatpush.msra.mxu0 0.0
        %817 = vmatpush.msra.mxu0 0.0
        %818 = vmatpush.msra.mxu0 0.0
        %819 = vmatpush.msra.mxu0 0.0
        %820 = vmatpush.msra.mxu0 %v419
        %821 = vmatmul.f32.gmra.mxu0 %v803
        %v822 = vpop.f32.mrf.mxu0
        %v823 = vadd.f32 0.0, %v822
        %824 = vdwg.mxu0
        %v825 = vadd.f32 %v723, %v823
        %v826 = vperm.slane %v386, 2
        %v827 = vadd.f32 %v825, %v826
        %v828 = vadd.f32 %v385, %v827
        %v829 = vsel %vm392, %v828, 0.0
        %830 = vadd.xlane.f32.xlu0 %v829
        %v831 = vpop.xlane.xlu0 %830
        %v832 = vrcp.pop 32.0
        %v833 = vmul.f32 32.0, %v832
        %v834 = vsub.f32 1.0, %v833
        %v835 = vmul.f32 %v832, %v834
        %v836 = vadd.f32 %v832, %v835
        %vm837 = vweird.f32 %v832
        %v838 = vsel %vm837, %v832, %v836
        %v839 = vmul.f32 %v831, %v838
        %v840 = vsub.f32 %v828, %v839
        %v841 = vmul.f32 %v840, %v840
        %v842 = vsel %vm392, %v841, 0.0
        %843 = vadd.xlane.f32.xlu0 %v842
        %v844 = vpop.xlane.xlu0 %843
        %v845 = vmul.f32 %v844, %v838
        %v846 = vadd.f32 %v845, 1e-05
        %v847 = vrsqrt.pop %v846
        %v848 = vmul.f32 %v847, %v846
        %v849 = vmul.f32 %v848, %v847
        %v850 = vmul.f32 0.5, %v849
        %v851 = vsub.f32 1.5, %v850
        %v852 = vmul.f32 %v847, %v851
        %vm853 = vweird.f32 %v846
        %vm854 = vweird.f32 %v847
        %vm855 = vmor %vm853, %vm854
        %v856 = vsel %vm855, %v847, %v852
        %v857 = vmul.f32 %v840, %v856
        %v858 = vperm.slane %v386, 3
        %v859 = vmul.f32 %v857, %v858
        %v860 = vperm.slane %v386, 4
        %v861 = vadd.f32 %v859, %v860
        %v862 = vld [vmem:[%s368] sm:$0xff]
        %v863 = vld [vmem:[%s368 + $0x8] sm:$0xff]
        %v864 = vld [vmem:[%s368 + $0x10] sm:$0xff]
        %v865 = vld [vmem:[%s368 + $0x18] sm:$0xff]
        %v866 = vperm.slane %v386, 1
        %v868 = vsel %vm392, %v861, 0
        %870 = vmatpush.msra.mxu0 0.0
        %871 = vmatpush.msra.mxu0 0.0
        %872 = vmatpush.msra.mxu0 0.0
        %873 = vmatpush.msra.mxu0 0.0
        %874 = vmatpush.msra.mxu0 0.0
        %875 = vmatpush.msra.mxu0 0.0
        %876 = vmatpush.msra.mxu0 0.0
        %877 = vmatpush.msra.mxu0 0.0
        %878 = vmatpush.msra.mxu0 0.0
        %879 = vmatpush.msra.mxu0 0.0
        %880 = vmatpush.msra.mxu0 0.0
        %881 = vmatpush.msra.mxu0 0.0
        %882 = vmatpush.msra.mxu0 %v865
        %883 = vmatpush.msra.mxu0 %v864
        %884 = vmatpush.msra.mxu0 %v863
        %885 = vmatpush.msra.mxu0 %v862
        %886 = vmatmul.f32.gmra.mxu0 %v868
        %v887 = vpop.f32.mrf.mxu0
        %v888 = vadd.f32 %v866, %v887
        %889 = vdwg.mxu0
        %v890 = vmax.f32 %v888, 0.0
        %v891 = vld [vmem:[%s373] sm:$0xff]
        %v892 = vld [vmem:[%s373 + $0x8] sm:$0xff]
        %v893 = vld [vmem:[%s373 + $0x10] sm:$0xff]
        %v894 = vld [vmem:[%s373 + $0x18] sm:$0xff]
        %v895 = vld [vmem:[%s373 + $0x20] sm:$0xff]
        %v896 = vld [vmem:[%s373 + $0x28] sm:$0xff]
        %v897 = vld [vmem:[%s373 + $0x30] sm:$0xff]
        %v898 = vld [vmem:[%s373 + $0x38] sm:$0xff]
        %v899 = vperm.slane %v386, 5
        %vm900 = vcmask 523264
        %v902 = vsel %vm900, %v890, 0
        %904 = vmatpush.msra.mxu0 0.0
        %905 = vmatpush.msra.mxu0 0.0
        %906 = vmatpush.msra.mxu0 0.0
        %907 = vmatpush.msra.mxu0 0.0
        %908 = vmatpush.msra.mxu0 0.0
        %909 = vmatpush.msra.mxu0 0.0
        %910 = vmatpush.msra.mxu0 0.0
        %911 = vmatpush.msra.mxu0 0.0
        %912 = vmatpush.msra.mxu0 %v898
        %913 = vmatpush.msra.mxu0 %v897
        %914 = vmatpush.msra.mxu0 %v896
        %915 = vmatpush.msra.mxu0 %v895
        %916 = vmatpush.msra.mxu0 %v894
        %917 = vmatpush.msra.mxu0 %v893
        %918 = vmatpush.msra.mxu0 %v892
        %919 = vmatpush.msra.mxu0 %v891
        %920 = vmatmul.f32.gmra.mxu0 %v902
        %v921 = vpop.f32.mrf.mxu0
        %v922 = vadd.f32 %v899, %v921
        %923 = vdwg.mxu0
        %v924 = vadd.f32 %v861, %v922
        %v925 = vsel %vm392, %v924, 0.0
        %926 = vadd.xlane.f32.xlu0 %v925
        %v927 = vpop.xlane.xlu0 %926
        %v928 = vmul.f32 %v927, %v838
        %v929 = vsub.f32 %v924, %v928
        %v930 = vmul.f32 %v929, %v929
        %v931 = vsel %vm392, %v930, 0.0
        %932 = vadd.xlane.f32.xlu0 %v931
        %v933 = vpop.xlane.xlu0 %932
        %v934 = vmul.f32 %v933, %v838
        %v935 = vadd.f32 %v934, 1e-05
        %v936 = vrsqrt.pop %v935
        %v937 = vmul.f32 %v936, %v935
        %v938 = vmul.f32 %v937, %v936
        %v939 = vmul.f32 0.5, %v938
        %v940 = vsub.f32 1.5, %v939
        %v941 = vmul.f32 %v936, %v940
        %vm942 = vweird.f32 %v935
        %vm943 = vweird.f32 %v936
        %vm944 = vmor %vm942, %vm943
        %v945 = vsel %vm944, %v936, %v941
        %v946 = vmul.f32 %v929, %v945
        %v947 = vperm.slane %v386, 6
        %v948 = vmul.f32 %v946, %v947
        %v949 = vperm.slane %v386, 7
        %v950 = vadd.f32 %v948, %v949
        %951 = vst.msk [vmem:[%s353] sm:$0xff] %vm392, %v950
        %s952 = sand.u32 %s199, 1
        %s953 = scalar_lea.sflag [#allocation4], %s952
        %s954 = sand.u32 %s199, 1
        %s955 = smul.addr %s954, 8
        %s956 = scalar_lea.vmem [#allocation5], %s955
        // Predicated region
        $region53: #{tpu_custom_call.1} parent=43 // pred_check
          %p957 = pneg %p209
        $region54: #{tpu_custom_call.1} parent=43 // pred_check_branch
          %959 = sbr.rel (%p957) target = $region56
        $region55: #{tpu_custom_call.1} parent=43 // pred_region
          %961 = vsyncadd %s953, 0
          %s962 = smul.addr %s27, 8
          %s963 = scalar_lea.hbm %s6, %s962
          %s965 = sshll.u32 %s956, 4
          %s966 = int_to_ptr.vmem [resolvable:$true] %s965
          %s967 = sshll.u32 %s963, 4
          %s968 = int_to_ptr.hbm [resolvable:$true] %s967
          %970 = dma.vmem_to_hbm [thread:$0]  %s966, 128, %s968, %s953
        $region56: #{tpu_custom_call.1} parent=43 // pred_fallthru
          _
      $region44: #{tpu_custom_call.1} parent=5 // pred_fallthru
        _
      %p971 = scmp.le.s32.totalorder 2, %s18
      // Predicated region
      $region57: #{tpu_custom_call.1} parent=5 // pred_check
        %p972 = pneg %p971
      $region58: #{tpu_custom_call.1} parent=5 // pred_check_branch
        %974 = sbr.rel (%p972) target = $region60
      $region59: #{tpu_custom_call.1} parent=5 // pred_region
        %s975 = ssub.s32 %s18, 2
        // Predicated region
        $region61: #{tpu_custom_call.1} parent=59 // pred_check
          %p976 = pneg %p215
        $region62: #{tpu_custom_call.1} parent=59 // pred_check_branch
          %978 = sbr.rel (%p976) target = $region64
        $region63: #{tpu_custom_call.1} parent=59 // pred_region
          %s979 = sand.u32 %s200, 1
          %s980 = scalar_lea.sflag [#allocation4], %s979
          %s981 = sand.u32 %s200, 1
          %s982 = smul.addr %s981, 8
          %s983 = scalar_lea.vmem [#allocation5], %s982
          %985 = dma.done %s980, 128
        $region64: #{tpu_custom_call.1} parent=59 // pred_fallthru
          _
      $region60: #{tpu_custom_call.1} parent=5 // pred_fallthru
        _
    $region6: #{tpu_custom_call.1} parent=1 // loop_footer
      %s22 = sadd.s32 1, %s18
    $region7: #{tpu_custom_call.1} parent=1 // loop_footer_branch
      %17 = sbr.rel target = $region3
    $region8: #{tpu_custom_call.1} parent=1 // loop_exit
      _
    %986 = vsyncpa [#allocation3], 1
    %s987 = scalar_lea.sflag [#allocation3], 1
    %988 = vsyncpa %s987, 1
    %989 = vsyncpa [#allocation4], 1
    %s990 = scalar_lea.sflag [#allocation4], 1
    %991 = vsyncpa %s990, 1

</llo_original>
